<compile_context>
chip_gen: v7x
topology: tpu7x:2x2x1
jax: 0.10.0
libtpu: 0.0.40
codegen_flags: <defaults>
</compile_context>

<pallas_src>
import functools
import math

import jax
import jax.numpy as jnp
from jax.experimental import pallas as pl
from jax.experimental.pallas import tpu as pltpu


def _cohere_ln_kernel(x_ref, w_ref, o_ref, *, eps, inv_h):
    # x_ref: (R, H), w_ref: (R, H) pre-tiled per-row weight, o_ref: (R, H)
    x = x_ref[...].astype(jnp.float32)
    # one-pass statistics: both reductions read the same loaded block
    s1 = jnp.sum(x, axis=-1, keepdims=True)
    s2 = jnp.sum(x * x, axis=-1, keepdims=True)
    mean = s1 * inv_h
    var = jnp.maximum(s2 * inv_h - mean * mean, 0.0)
    y = (x - mean) * jax.lax.rsqrt(var + eps)
    y = w_ref[...].astype(jnp.float32) * y
    o_ref[...] = y.astype(o_ref.dtype)


def cohere_layer_norm(hidden_states, weight, eps=1e-5, *, row_block=4096):
    """hidden_states: [M, H] with M divisible by weight.shape[0]; weight: [N, H]."""
    N, H = weight.shape
    M = hidden_states.shape[0]
    assert M % N == 0, "rows must be divisible by num_heads"

    # Rows per block: multiple of N (so the per-row weight mapping is the same
    # in every block) and of 16 (bf16 sublane packing / (8,128) constraint).
    # Clamp to just cover M so no block is larger than needed. Sweep row_block
    # per chip if desired; 4096 rows ~ 1 MiB bf16 input per block.
    r_base = (N * 16) // math.gcd(N, 16)          # lcm(N, 16)
    n_base_blocks = -(-M // r_base)               # cdiv(M, r_base)
    r = min(max(row_block // r_base, 1), n_base_blocks) * r_base
    grid = -(-M // r)                             # cdiv(M, r); last block may be partial

    # Pre-tile weight to (r, H): block-local row j uses head (j % N) because
    # every block start t*r is a multiple of N. Stays VMEM-resident across the
    # whole grid (index_map always returns block (0, 0)).
    w_tiled = jnp.tile(weight, (r // N, 1))

    kernel = functools.partial(_cohere_ln_kernel, eps=float(eps), inv_h=1.0 / H)

    out = pl.pallas_call(
        kernel,
        out_shape=jax.ShapeDtypeStruct((M, H), hidden_states.dtype),
        grid_spec=pltpu.PrefetchScalarGridSpec(
            num_scalar_prefetch=0,
            grid=(grid,),
            in_specs=[
                pl.BlockSpec((r, H), lambda t: (t, 0)),   # x tile
                pl.BlockSpec((r, H), lambda t: (0, 0)),   # resident weight tile
            ],
            out_specs=pl.BlockSpec((r, H), lambda t: (t, 0)),
        ),
        compiler_params=pltpu.CompilerParams(
            dimension_semantics=("parallel",),
        ),
    )(hidden_states, w_tiled)
    return out


def _reference(hidden_states, weight, eps):
    N, H = weight.shape
    x = hidden_states.reshape(-1, N, H).astype(jnp.float32)
    mean = x.mean(-1, keepdims=True)
    xm = x - mean
    var = (xm * xm).mean(-1, keepdims=True)
    y = xm * jax.lax.rsqrt(var + eps)
    y = weight.astype(jnp.float32) * y
    return y.reshape(-1, H).astype(hidden_states.dtype)


if __name__ == "__main__":
    key = jax.random.PRNGKey(0)
    k1, k2 = jax.random.split(key)

    num_heads = 4      # sharded dim of weight
    head_dim = 128     # lane-aligned last dim
    tokens = 9         # odd token count -> exercises partial last block below
    eps = 1e-5

    weight = (jax.random.normal(k1, (num_heads, head_dim), jnp.float32) * 0.1
              + 1.0).astype(jnp.bfloat16)
    x = jax.random.normal(
        k2, (tokens * num_heads, head_dim), jnp.float32
    ).astype(jnp.bfloat16)

    ref = _reference(x, weight, eps)

    # 1) default big-block config (single block here since the demo is tiny)
    out = jax.block_until_ready(cohere_layer_norm(x, weight, eps))
    assert out.shape == x.shape and out.dtype == x.dtype
    err = jnp.max(jnp.abs(out.astype(jnp.float32) - ref.astype(jnp.float32)))
    assert float(err) < 5e-2, f"max abs err {err}"

    # 2) small-block config: multiple grid steps + masked partial last block
    out2 = jax.block_until_ready(cohere_layer_norm(x, weight, eps, row_block=16))
    err2 = jnp.max(jnp.abs(out2.astype(jnp.float32) - ref.astype(jnp.float32)))
    assert float(err2) < 5e-2, f"max abs err (multi-block) {err2}"

    print("KERNEL_OK")
</pallas_src>

<mosaic_0001>
module attributes {stable_mosaic.version = 11 : i64} {
  func.func @_cohere_ln_kernel(%arg0: i32, %arg1: memref<48x128xbf16, #tpu.memory_space<vmem>>, %arg2: memref<48x128xbf16, #tpu.memory_space<vmem>>, %arg3: memref<48x128xbf16, #tpu.memory_space<vmem>>) attributes {dimension_semantics = [#tpu.dimension_semantics<parallel>], iteration_bounds = array<i64: 1>, scalar_prefetch = 0 : i64, scratch_operands = 0 : i64, tpu.core_type = #tpu.core_type<tc>, window_params = [{transform_indices = @transform_0, window_bounds = array<i64: 48, 128>}, {pipeline_mode = #tpu.pipeline_mode<synchronous>, transform_indices = @transform_1, window_bounds = array<i64: 48, 128>}, {transform_indices = @transform_2, window_bounds = array<i64: 48, 128>}]} {
    %c0 = arith.constant 0 : index
    %c0_0 = arith.constant 0 : index
    %0 = vector.load %arg1[%c0, %c0_0] : memref<48x128xbf16, #tpu.memory_space<vmem>>, vector<48x128xbf16>
    %1 = arith.extf %0 : vector<48x128xbf16> to vector<48x128xf32>
    %cst = arith.constant dense<0.000000e+00> : vector<48xf32>
    %2 = vector.multi_reduction <add>, %1, %cst [1] : vector<48x128xf32> to vector<48xf32>
    %3 = vector.shape_cast %2 : vector<48xf32> to vector<48x1xf32>
    %4 = arith.mulf %1, %1 : vector<48x128xf32>
    %cst_1 = arith.constant dense<0.000000e+00> : vector<48xf32>
    %5 = vector.multi_reduction <add>, %4, %cst_1 [1] : vector<48x128xf32> to vector<48xf32>
    %6 = vector.shape_cast %5 : vector<48xf32> to vector<48x1xf32>
    %cst_2 = arith.constant 7.812500e-03 : f32
    %7 = vector.broadcast %cst_2 : f32 to vector<48x1xf32>
    %8 = arith.mulf %3, %7 : vector<48x1xf32>
    %cst_3 = arith.constant 7.812500e-03 : f32
    %9 = vector.broadcast %cst_3 : f32 to vector<48x1xf32>
    %10 = arith.mulf %6, %9 : vector<48x1xf32>
    %11 = arith.mulf %8, %8 : vector<48x1xf32>
    %12 = arith.subf %10, %11 : vector<48x1xf32>
    %cst_4 = arith.constant 0.000000e+00 : f32
    %13 = vector.broadcast %cst_4 : f32 to vector<48x1xf32>
    %14 = arith.maximumf %12, %13 : vector<48x1xf32>
    %15 = vector.broadcast %8 : vector<48x1xf32> to vector<48x128xf32>
    %16 = arith.subf %1, %15 : vector<48x128xf32>
    %cst_5 = arith.constant 9.99999974E-6 : f32
    %17 = vector.broadcast %cst_5 : f32 to vector<48x1xf32>
    %18 = arith.addf %14, %17 : vector<48x1xf32>
    %19 = math.rsqrt %18 : vector<48x1xf32>
    %20 = vector.broadcast %19 : vector<48x1xf32> to vector<48x128xf32>
    %21 = arith.mulf %16, %20 : vector<48x128xf32>
    %c0_6 = arith.constant 0 : index
    %c0_7 = arith.constant 0 : index
    %22 = vector.load %arg2[%c0_6, %c0_7] : memref<48x128xbf16, #tpu.memory_space<vmem>>, vector<48x128xbf16>
    %23 = arith.extf %22 : vector<48x128xbf16> to vector<48x128xf32>
    %24 = arith.mulf %23, %21 : vector<48x128xf32>
    %25 = arith.truncf %24 : vector<48x128xf32> to vector<48x128xbf16>
    %c0_8 = arith.constant 0 : index
    %c0_9 = arith.constant 0 : index
    %26 = vector.load %arg3[%c0_8, %c0_9] : memref<48x128xbf16, #tpu.memory_space<vmem>>, vector<48x128xbf16>
    tpu.vector_store %arg3[%c0_8, %c0_9], %25 {strides = array<i32>} : memref<48x128xbf16, #tpu.memory_space<vmem>>, vector<48x128xbf16>,
    return
  }
  func.func @transform_0(%arg0: i32) -> (i32, i32) {
    %c0_i32 = arith.constant 0 : i32
    %c0_i32_0 = arith.constant 0 : i32
    return %arg0, %c0_i32 : i32, i32
  }
  func.func @transform_1(%arg0: i32) -> (i32, i32) {
    %c0_i32 = arith.constant 0 : i32
    %c0_i32_0 = arith.constant 0 : i32
    %c0_i32_1 = arith.constant 0 : i32
    return %c0_i32, %c0_i32_0 : i32, i32
  }
  func.func @transform_2(%arg0: i32) -> (i32, i32) {
    %c0_i32 = arith.constant 0 : i32
    %c0_i32_0 = arith.constant 0 : i32
    return %arg0, %c0_i32 : i32, i32
  }
}

</mosaic_0001>

<llo_original>
// kernel: tpu_custom_call.1
$region0: #{tpu_custom_call.1}
  #allocation0 [shape = 'u32[]', space=smem, size = 0x4, offset = 0x4, fixed_abs, tag = 'smem constant byte address 0x4 - core index']
  #allocation1 [shape = 'u32[144,128]{1,0:T(1,128)}', space=vmem, size = 0x12000, scoped, tag = 'internal scratch']
  %s0 = inlined_call_operand.hbm [shape: bf16[36,128], index: 0, kind: input, shape index: {}]
  %s1 = inlined_call_operand.hbm [shape: bf16[48,128], index: 1, kind: input, shape index: {}]
  %s2 = inlined_call_operand.hbm [shape: bf16[36,128], index: 2, kind: output, shape index: {}]
  %s3 = sld [smem:[#allocation0]]
  $region26: #{tpu_custom_call.1} parent=0
    _
  %s5 = ssub.s32 1, %s3
  %s6 = scalar_select 0, %s5, %s3
  $region1: #{tpu_custom_call.1} parent=0
    #allocation2 [shape = 'u8[12288]{0}', space=vmem, size = 0x3000, scoped, tag = 'input window, operand 0, single buffered']
    #allocation3 [shape = 's32[1]{0}', space=sflag, size = 0x4, scoped, tag = 'scoped memory for tpu_custom_call.1']
    #allocation4 [shape = 's32[1]{0}', space=sflag, size = 0x4, scoped, tag = 'scoped memory for tpu_custom_call.1']
    #allocation5 [shape = 'u8[12288]{0}', space=vmem, size = 0x3000, scoped, tag = 'input window, operand 1, single buffered']
    #allocation6 [shape = 's32[1]{0}', space=sflag, size = 0x4, scoped, tag = 'scoped memory for tpu_custom_call.1']
    #allocation7 [shape = 'u8[12288]{0}', space=vmem, size = 0x3000, scoped, tag = 'output window, operand 0, single buffered']
    %7 = vsyncpa [#allocation3], 0
    %8 = vsyncpa [#allocation6], 0
    %9 = vsyncpa [#allocation4], 0
    // Predicated region
    $region2: #{tpu_custom_call.1} parent=1 // pred_check
      _
    $region3: #{tpu_custom_call.1} parent=1 // pred_check_branch
      %11 = sbr.rel (0) target = $region5
    $region4: #{tpu_custom_call.1} parent=1 // pred_region
      %s13 = ssub.s32 384, 320
      %14 = vsyncadd [#allocation3], %s13
      %s15 = sshll.u32 [#allocation2], 4
      %s16 = int_to_ptr.vmem [resolvable:$true] %s15
      %21 = dma.hbm_to_vmem [thread:$0]  %s0, 320, %s16, [#allocation3], 64, 64, 4
    $region5: #{tpu_custom_call.1} parent=1 // pred_fallthru
      _
    // Predicated region
    $region6: #{tpu_custom_call.1} parent=1 // pred_check
      _
    $region7: #{tpu_custom_call.1} parent=1 // pred_check_branch
      %23 = sbr.rel (0) target = $region9
    $region8: #{tpu_custom_call.1} parent=1 // pred_region
      %s25 = ssub.s32 384, 384
      %26 = vsyncadd [#allocation6], %s25
      %s27 = sshll.u32 [#allocation5], 4
      %s28 = int_to_ptr.vmem [resolvable:$true] %s27
      %33 = dma.hbm_to_vmem [thread:$0]  %s1, 384, %s28, [#allocation6], 64, 64, 4
    $region9: #{tpu_custom_call.1} parent=1 // pred_fallthru
      _
    // Predicated region
    $region10: #{tpu_custom_call.1} parent=1 // pred_check
      _
    $region11: #{tpu_custom_call.1} parent=1 // pred_check_branch
      %35 = sbr.rel (0) target = $region13
    $region12: #{tpu_custom_call.1} parent=1 // pred_region
      %36 = dma.done [#allocation3], 384
    $region13: #{tpu_custom_call.1} parent=1 // pred_fallthru
      _
    // Predicated region
    $region14: #{tpu_custom_call.1} parent=1 // pred_check
      _
    $region15: #{tpu_custom_call.1} parent=1 // pred_check_branch
      %38 = sbr.rel (0) target = $region17
    $region16: #{tpu_custom_call.1} parent=1 // pred_region
      %39 = dma.done [#allocation6], 384
    $region17: #{tpu_custom_call.1} parent=1 // pred_fallthru
      _
    %v40 = vld [vmem:[#allocation2] sm:$0xf]
    %v41 = vld [vmem:[#allocation2 + $0x4] sm:$0xf]
    %v42 = vld [vmem:[#allocation2 + $0x8] sm:$0xf]
    %v43 = vld [vmem:[#allocation2 + $0xc] sm:$0xf]
    %v44 = vld [vmem:[#allocation2 + $0x10] sm:$0xf]
    %v45 = vld [vmem:[#allocation2 + $0x14] sm:$0xf]
    %v46 = vunpack.c.l.bf16 %v40
    %v47 = vunpack.c.l.bf16 %v41
    %v48 = vunpack.c.l.bf16 %v42
    %v49 = vunpack.c.l.bf16 %v43
    %v50 = vunpack.c.l.bf16 %v44
    %v51 = vunpack.c.l.bf16 %v45
    %52 = vadd.xlane.f32.xlu0 %v46
    %v53 = vpop.xlane.xlu0 %52
    %54 = vadd.xlane.f32.xlu0 %v47
    %v55 = vpop.xlane.xlu0 %54
    %56 = vadd.xlane.f32.xlu0 %v48
    %v57 = vpop.xlane.xlu0 %56
    %58 = vadd.xlane.f32.xlu0 %v49
    %v59 = vpop.xlane.xlu0 %58
    %60 = vadd.xlane.f32.xlu0 %v50
    %v61 = vpop.xlane.xlu0 %60
    %62 = vadd.xlane.f32.xlu0 %v51
    %v63 = vpop.xlane.xlu0 %62
    %v64 = vmul.f32 %v46, %v46
    %v65 = vmul.f32 %v47, %v47
    %v66 = vmul.f32 %v48, %v48
    %v67 = vmul.f32 %v49, %v49
    %v68 = vmul.f32 %v50, %v50
    %v69 = vmul.f32 %v51, %v51
    %70 = vadd.xlane.f32.xlu0 %v64
    %v71 = vpop.xlane.xlu0 %70
    %72 = vadd.xlane.f32.xlu0 %v65
    %v73 = vpop.xlane.xlu0 %72
    %74 = vadd.xlane.f32.xlu0 %v66
    %v75 = vpop.xlane.xlu0 %74
    %76 = vadd.xlane.f32.xlu0 %v67
    %v77 = vpop.xlane.xlu0 %76
    %78 = vadd.xlane.f32.xlu0 %v68
    %v79 = vpop.xlane.xlu0 %78
    %80 = vadd.xlane.f32.xlu0 %v69
    %v81 = vpop.xlane.xlu0 %80
    %v82 = vmul.f32 %v53, 0.0078125
    %v83 = vmul.f32 %v55, 0.0078125
    %v84 = vmul.f32 %v57, 0.0078125
    %v85 = vmul.f32 %v59, 0.0078125
    %v86 = vmul.f32 %v61, 0.0078125
    %v87 = vmul.f32 %v63, 0.0078125
    %v88 = vmul.f32 %v71, 0.0078125
    %v89 = vmul.f32 %v73, 0.0078125
    %v90 = vmul.f32 %v75, 0.0078125
    %v91 = vmul.f32 %v77, 0.0078125
    %v92 = vmul.f32 %v79, 0.0078125
    %v93 = vmul.f32 %v81, 0.0078125
    %v94 = vmul.f32 %v82, %v82
    %v95 = vmul.f32 %v83, %v83
    %v96 = vmul.f32 %v84, %v84
    %v97 = vmul.f32 %v85, %v85
    %v98 = vmul.f32 %v86, %v86
    %v99 = vmul.f32 %v87, %v87
    %v100 = vsub.f32 %v88, %v94
    %v101 = vsub.f32 %v89, %v95
    %v102 = vsub.f32 %v90, %v96
    %v103 = vsub.f32 %v91, %v97
    %v104 = vsub.f32 %v92, %v98
    %v105 = vsub.f32 %v93, %v99
    %v106 = vmax.f32 %v100, 0.0
    %v107 = vmax.f32 %v101, 0.0
    %v108 = vmax.f32 %v102, 0.0
    %v109 = vmax.f32 %v103, 0.0
    %v110 = vmax.f32 %v104, 0.0
    %v111 = vmax.f32 %v105, 0.0
    %v112 = vsub.f32 %v46, %v82
    %v113 = vsub.f32 %v47, %v83
    %v114 = vsub.f32 %v48, %v84
    %v115 = vsub.f32 %v49, %v85
    %v116 = vsub.f32 %v50, %v86
    %v117 = vsub.f32 %v51, %v87
    %v118 = vadd.f32 %v106, 1e-05
    %v119 = vadd.f32 %v107, 1e-05
    %v120 = vadd.f32 %v108, 1e-05
    %v121 = vadd.f32 %v109, 1e-05
    %v122 = vadd.f32 %v110, 1e-05
    %v123 = vadd.f32 %v111, 1e-05
    %v124 = vrsqrt.pop %v118
    %v125 = vrsqrt.pop %v119
    %v126 = vrsqrt.pop %v120
    %v127 = vrsqrt.pop %v121
    %v128 = vrsqrt.pop %v122
    %v129 = vrsqrt.pop %v123
    %v130 = vmul.f32 %v112, %v124
    %v131 = vmul.f32 %v113, %v125
    %v132 = vmul.f32 %v114, %v126
    %v133 = vmul.f32 %v115, %v127
    %v134 = vmul.f32 %v116, %v128
    %v135 = vmul.f32 %v117, %v129
    %v136 = vld [vmem:[#allocation5] sm:$0xf]
    %v137 = vld [vmem:[#allocation5 + $0x4] sm:$0xf]
    %v138 = vld [vmem:[#allocation5 + $0x8] sm:$0xf]
    %v139 = vld [vmem:[#allocation5 + $0xc] sm:$0xf]
    %v140 = vld [vmem:[#allocation5 + $0x10] sm:$0xf]
    %v141 = vld [vmem:[#allocation5 + $0x14] sm:$0xf]
    %v142 = vunpack.c.l.bf16 %v136
    %v143 = vunpack.c.l.bf16 %v137
    %v144 = vunpack.c.l.bf16 %v138
    %v145 = vunpack.c.l.bf16 %v139
    %v146 = vunpack.c.l.bf16 %v140
    %v147 = vunpack.c.l.bf16 %v141
    %v148 = vmul.f32 %v142, %v130
    %v149 = vmul.f32 %v143, %v131
    %v150 = vmul.f32 %v144, %v132
    %v151 = vmul.f32 %v145, %v133
    %v152 = vmul.f32 %v146, %v134
    %v153 = vmul.f32 %v147, %v135
    %v154 = vpack.c.bf16 %v149, %v148
    %v155 = vpack.c.bf16 %v151, %v150
    %v156 = vpack.c.bf16 %v153, %v152
    %v160 = vunpack.c.l.b16 %v154
    %v161 = vunpack.c.h.b16 %v154
    %v162 = vunpack.c.l.b16 %v155
    %v163 = vunpack.c.h.b16 %v155
    %v164 = vunpack.c.l.b16 %v156
    %v165 = vunpack.c.h.b16 %v156
    %v166 = vpack.c.b16 %v160, %v160
    %v167 = vpack.c.b16 %v161, %v161
    %v168 = vpack.c.b16 %v162, %v162
    %v169 = vpack.c.b16 %v163, %v163
    %v170 = vpack.c.b16 %v164, %v164
    %v171 = vpack.c.b16 %v165, %v165
    %178 = vst [vmem:[#allocation7] sm:$0xf] %v166
    %179 = vst [vmem:[#allocation7 + $0x4] sm:$0xf] %v167
    %180 = vst [vmem:[#allocation7 + $0x8] sm:$0xf] %v168
    %181 = vst [vmem:[#allocation7 + $0xc] sm:$0xf] %v169
    %182 = vst [vmem:[#allocation7 + $0x10] sm:$0xf] %v170
    %183 = vst [vmem:[#allocation7 + $0x14] sm:$0xf] %v171
    // Predicated region
    $region18: #{tpu_custom_call.1} parent=1 // pred_check
      _
    $region19: #{tpu_custom_call.1} parent=1 // pred_check_branch
      %185 = sbr.rel (0) target = $region21
    $region20: #{tpu_custom_call.1} parent=1 // pred_region
      %s187 = ssub.s32 384, 320
      %188 = vsyncadd [#allocation4], %s187
      %s189 = sshll.u32 [#allocation7], 4
      %s190 = int_to_ptr.vmem [resolvable:$true] %s189
      %195 = dma.vmem_to_hbm [thread:$0]  %s190, 320, %s2, [#allocation4], 64, 64, 4
    $region21: #{tpu_custom_call.1} parent=1 // pred_fallthru
      _
    // Predicated region
    $region22: #{tpu_custom_call.1} parent=1 // pred_check
      _
    $region23: #{tpu_custom_call.1} parent=1 // pred_check_branch
      %197 = sbr.rel (0) target = $region25
    $region24: #{tpu_custom_call.1} parent=1 // pred_region
      %198 = dma.done [#allocation4], 384
    $region25: #{tpu_custom_call.1} parent=1 // pred_fallthru
      _
    %199 = vsyncpa [#allocation3], 1
    %200 = vsyncpa [#allocation6], 1
    %201 = vsyncpa [#allocation4], 1

</llo_original>
